<compile_context>
chip_gen: v7x
topology: tpu7x:2x2x1
jax: 0.10.0
libtpu: 0.0.40
codegen_flags: <defaults>
</compile_context>

<pallas_src>
import functools

import jax
import jax.numpy as jnp
from jax.experimental import pallas as pl
from jax.experimental.pallas import tpu as pltpu

NEG_SLOPE = 0.01  # PyTorch nn.LeakyReLU default negative_slope


def _leaky_relu(x):
    # For 0 < slope < 1:  leaky_relu(x) == max(x, slope*x)
    return jnp.maximum(x, NEG_SLOPE * x)


def _mte_kernel(x_ref, w1_ref, b1_ref, w2_ref, b2_ref, wh_ref, bh_ref, o_ref):
    # x tile: (TB, F) in compute dtype (bf16 by default); weights bf16,
    # biases f32 as (1, out). All matmuls accumulate in f32 on the MXU.
    x = x_ref[...]

    h = jnp.dot(x, w1_ref[...], preferred_element_type=jnp.float32) + b1_ref[...]
    h = _leaky_relu(h)

    h = jnp.dot(h.astype(w2_ref.dtype), w2_ref[...],
                preferred_element_type=jnp.float32) + b2_ref[...]
    h = _leaky_relu(h)

    # Fused heads: one (TB, L) x (L, 4F) matmul, one lane-dense output store.
    v = jnp.dot(h.astype(wh_ref.dtype), wh_ref[...],
                preferred_element_type=jnp.float32) + bh_ref[...]
    o_ref[...] = v.astype(o_ref.dtype)


def _round_up(x, m):
    return ((x + m - 1) // m) * m


@functools.partial(jax.jit, static_argnames=("block_rows", "compute_dtype"))
def multitask_explainer_forward(x, params, *, block_rows=256,
                                compute_dtype=jnp.bfloat16):
    """x: (B, num_features) float32. Returns (v1, v2), each (B, 2*num_features)."""
    B, F = x.shape
    L = params["w1"].shape[1]
    head_dim = params["wh1"].shape[1]          # 2 * num_features
    out_dim = 2 * head_dim                     # fused: 4 * num_features

    # --- wrapper-side packing (once per call, outside the kernel) ----------
    cd = compute_dtype
    w1 = params["w1"].astype(cd)
    w2 = params["w2"].astype(cd)
    wh = jnp.concatenate([params["wh1"], params["wh2"]], axis=1).astype(cd)
    b1 = params["b1"].reshape(1, L).astype(jnp.float32)
    b2 = params["b2"].reshape(1, L).astype(jnp.float32)
    bh = jnp.concatenate([params["bh1"], params["bh2"]], axis=0
                         ).reshape(1, out_dim).astype(jnp.float32)

    # --- batch tiling: pad B up to a multiple of the row tile --------------
    TB = block_rows if B > block_rows else _round_up(max(B, 1), 8)
    Bp = _round_up(B, TB)
    xp = x.astype(cd)
    if Bp != B:
        xp = jnp.pad(xp, ((0, Bp - B), (0, 0)))
    num_blocks = Bp // TB

    resident = lambda i: (0, 0)  # weights/biases stay in VMEM across the grid

    out = pl.pallas_call(
        _mte_kernel,
        out_shape=jax.ShapeDtypeStruct((Bp, out_dim), jnp.float32),
        grid=(num_blocks,),
        in_specs=[
            pl.BlockSpec((TB, F), lambda i: (i, 0)),        # x tile (pipelined)
            pl.BlockSpec((F, L), resident),                 # W1
            pl.BlockSpec((1, L), resident),                 # b1
            pl.BlockSpec((L, L), resident),                 # W2
            pl.BlockSpec((1, L), resident),                 # b2
            pl.BlockSpec((L, out_dim), resident),           # fused Wh
            pl.BlockSpec((1, out_dim), resident),           # fused bh
        ],
        out_specs=pl.BlockSpec((TB, out_dim), lambda i: (i, 0)),
        compiler_params=pltpu.CompilerParams(
            dimension_semantics=("parallel",)),
    )(xp, w1, b1, w2, b2, wh, bh)

    v1 = out[:B, :head_dim]
    v2 = out[:B, head_dim:]
    return v1, v2


def init_params(key, num_features, layer_size):
    """PyTorch-Linear-style init (uniform +/- 1/sqrt(fan_in)); weights stored (in, out)."""
    def linear(key, fan_in, fan_out):
        kw, kb = jax.random.split(key)
        bound = 1.0 / (fan_in ** 0.5)
        w = jax.random.uniform(kw, (fan_in, fan_out), jnp.float32, -bound, bound)
        b = jax.random.uniform(kb, (fan_out,), jnp.float32, -bound, bound)
        return w, b

    k1, k2, k3, k4 = jax.random.split(key, 4)
    w1, b1 = linear(k1, num_features, layer_size)
    w2, b2 = linear(k2, layer_size, layer_size)
    wh1, bh1 = linear(k3, layer_size, 2 * num_features)
    wh2, bh2 = linear(k4, layer_size, 2 * num_features)
    return dict(w1=w1, b1=b1, w2=w2, b2=b2,
                wh1=wh1, bh1=bh1, wh2=wh2, bh2=bh2)


def reference_forward(x, p, compute_dtype=jnp.float32):
    """Plain-JAX reference with the same matmul dtype flow as the kernel."""
    cd = compute_dtype

    def dot(a, w):
        return jnp.dot(a.astype(cd), w.astype(cd),
                       preferred_element_type=jnp.float32)

    h = _leaky_relu(dot(x, p["w1"]) + p["b1"])
    h = _leaky_relu(dot(h, p["w2"]) + p["b2"])
    v1 = dot(h, p["wh1"]) + p["bh1"]
    v2 = dot(h, p["wh2"]) + p["bh2"]
    return v1, v2


if __name__ == "__main__":
    num_features = 16   # stand-in for len(feature_names)
    layer_size = 32

    key = jax.random.PRNGKey(0)
    kx, kp, kx2 = jax.random.split(key, 3)
    params = init_params(kp, num_features, layer_size)

    # --- small batch (single grid step) ------------------------------------
    batch = 8
    x = jax.random.normal(kx, (batch, num_features), jnp.float32)
    v1, v2 = multitask_explainer_forward(x, params)
    jax.block_until_ready((v1, v2))

    r1, r2 = reference_forward(x, params, compute_dtype=jnp.bfloat16)
    assert v1.shape == (batch, 2 * num_features)
    assert v2.shape == (batch, 2 * num_features)
    assert jnp.allclose(v1, r1, atol=1e-2, rtol=1e-2)
    assert jnp.allclose(v2, r2, atol=1e-2, rtol=1e-2)

    # --- larger, non-multiple batch (exercises grid tiling + padding) ------
    batch2 = 300
    x2 = jax.random.normal(kx2, (batch2, num_features), jnp.float32)
    w1, w2 = multitask_explainer_forward(x2, params, block_rows=128)
    jax.block_until_ready((w1, w2))

    s1, s2 = reference_forward(x2, params, compute_dtype=jnp.bfloat16)
    assert w1.shape == (batch2, 2 * num_features)
    assert w2.shape == (batch2, 2 * num_features)
    assert jnp.allclose(w1, s1, atol=1e-2, rtol=1e-2)
    assert jnp.allclose(w2, s2, atol=1e-2, rtol=1e-2)

    print("KERNEL_OK")
</pallas_src>

<mosaic_0001>
module attributes {stable_mosaic.version = 11 : i64} {
  func.func @_mte_kernel(%arg0: i32, %arg1: memref<8x16xbf16, #tpu.memory_space<vmem>>, %arg2: memref<16x32xbf16, #tpu.memory_space<vmem>>, %arg3: memref<1x32xf32, #tpu.memory_space<vmem>>, %arg4: memref<32x32xbf16, #tpu.memory_space<vmem>>, %arg5: memref<1x32xf32, #tpu.memory_space<vmem>>, %arg6: memref<32x64xbf16, #tpu.memory_space<vmem>>, %arg7: memref<1x64xf32, #tpu.memory_space<vmem>>, %arg8: memref<8x64xf32, #tpu.memory_space<vmem>>) attributes {dimension_semantics = [#tpu.dimension_semantics<parallel>], iteration_bounds = array<i64: 1>, scalar_prefetch = 0 : i64, scratch_operands = 0 : i64, tpu.core_type = #tpu.core_type<tc>, window_params = [{transform_indices = @transform_0, window_bounds = array<i64: 8, 16>}, {pipeline_mode = #tpu.pipeline_mode<synchronous>, transform_indices = @transform_1, window_bounds = array<i64: 16, 32>}, {pipeline_mode = #tpu.pipeline_mode<synchronous>, transform_indices = @transform_2, window_bounds = array<i64: 1, 32>}, {pipeline_mode = #tpu.pipeline_mode<synchronous>, transform_indices = @transform_3, window_bounds = array<i64: 32, 32>}, {pipeline_mode = #tpu.pipeline_mode<synchronous>, transform_indices = @transform_4, window_bounds = array<i64: 1, 32>}, {pipeline_mode = #tpu.pipeline_mode<synchronous>, transform_indices = @transform_5, window_bounds = array<i64: 32, 64>}, {pipeline_mode = #tpu.pipeline_mode<synchronous>, transform_indices = @transform_6, window_bounds = array<i64: 1, 64>}, {transform_indices = @transform_7, window_bounds = array<i64: 8, 64>}]} {
    %c0 = arith.constant 0 : index
    %c0_0 = arith.constant 0 : index
    %0 = vector.load %arg1[%c0, %c0_0] : memref<8x16xbf16, #tpu.memory_space<vmem>>, vector<8x16xbf16>
    %c0_1 = arith.constant 0 : index
    %c0_2 = arith.constant 0 : index
    %1 = vector.load %arg2[%c0_1, %c0_2] : memref<16x32xbf16, #tpu.memory_space<vmem>>, vector<16x32xbf16>
    %cst = arith.constant dense<0.000000e+00> : vector<8x32xf32>
    %2 = tpu.matmul %0, %1, %cst {dimension_numbers = #tpu.dot_dimension_numbers<[1], [0], [0], [1], [0, 0, 1, 1], [], []>} : vector<8x16xbf16>, vector<16x32xbf16>, vector<8x32xf32> -> vector<8x32xf32>
    %c0_3 = arith.constant 0 : index
    %c0_4 = arith.constant 0 : index
    %3 = vector.load %arg3[%c0_3, %c0_4] : memref<1x32xf32, #tpu.memory_space<vmem>>, vector<1x32xf32>
    %4 = vector.broadcast %3 : vector<1x32xf32> to vector<8x32xf32>
    %5 = arith.addf %2, %4 : vector<8x32xf32>
    %cst_5 = arith.constant 0.00999999977 : f32
    %6 = vector.broadcast %cst_5 : f32 to vector<8x32xf32>
    %7 = arith.mulf %6, %5 : vector<8x32xf32>
    %8 = arith.maximumf %5, %7 : vector<8x32xf32>
    %9 = arith.truncf %8 : vector<8x32xf32> to vector<8x32xbf16>
    %c0_6 = arith.constant 0 : index
    %c0_7 = arith.constant 0 : index
    %10 = vector.load %arg4[%c0_6, %c0_7] : memref<32x32xbf16, #tpu.memory_space<vmem>>, vector<32x32xbf16>
    %cst_8 = arith.constant dense<0.000000e+00> : vector<8x32xf32>
    %11 = tpu.matmul %9, %10, %cst_8 {dimension_numbers = #tpu.dot_dimension_numbers<[1], [0], [0], [1], [0, 0, 1, 1], [], []>} : vector<8x32xbf16>, vector<32x32xbf16>, vector<8x32xf32> -> vector<8x32xf32>
    %c0_9 = arith.constant 0 : index
    %c0_10 = arith.constant 0 : index
    %12 = vector.load %arg5[%c0_9, %c0_10] : memref<1x32xf32, #tpu.memory_space<vmem>>, vector<1x32xf32>
    %13 = vector.broadcast %12 : vector<1x32xf32> to vector<8x32xf32>
    %14 = arith.addf %11, %13 : vector<8x32xf32>
    %cst_11 = arith.constant 0.00999999977 : f32
    %15 = vector.broadcast %cst_11 : f32 to vector<8x32xf32>
    %16 = arith.mulf %15, %14 : vector<8x32xf32>
    %17 = arith.maximumf %14, %16 : vector<8x32xf32>
    %18 = arith.truncf %17 : vector<8x32xf32> to vector<8x32xbf16>
    %c0_12 = arith.constant 0 : index
    %c0_13 = arith.constant 0 : index
    %19 = vector.load %arg6[%c0_12, %c0_13] : memref<32x64xbf16, #tpu.memory_space<vmem>>, vector<32x64xbf16>
    %cst_14 = arith.constant dense<0.000000e+00> : vector<8x64xf32>
    %20 = tpu.matmul %18, %19, %cst_14 {dimension_numbers = #tpu.dot_dimension_numbers<[1], [0], [0], [1], [0, 0, 1, 1], [], []>} : vector<8x32xbf16>, vector<32x64xbf16>, vector<8x64xf32> -> vector<8x64xf32>
    %c0_15 = arith.constant 0 : index
    %c0_16 = arith.constant 0 : index
    %21 = vector.load %arg7[%c0_15, %c0_16] : memref<1x64xf32, #tpu.memory_space<vmem>>, vector<1x64xf32>
    %22 = vector.broadcast %21 : vector<1x64xf32> to vector<8x64xf32>
    %23 = arith.addf %20, %22 : vector<8x64xf32>
    %c0_17 = arith.constant 0 : index
    %c0_18 = arith.constant 0 : index
    %24 = vector.load %arg8[%c0_17, %c0_18] : memref<8x64xf32, #tpu.memory_space<vmem>>, vector<8x64xf32>
    tpu.vector_store %arg8[%c0_17, %c0_18], %23 {strides = array<i32>} : memref<8x64xf32, #tpu.memory_space<vmem>>, vector<8x64xf32>,
    return
  }
  func.func @transform_0(%arg0: i32) -> (i32, i32) {
    %c0_i32 = arith.constant 0 : i32
    %c0_i32_0 = arith.constant 0 : i32
    return %arg0, %c0_i32 : i32, i32
  }
  func.func @transform_1(%arg0: i32) -> (i32, i32) {
    %c0_i32 = arith.constant 0 : i32
    %c0_i32_0 = arith.constant 0 : i32
    %c0_i32_1 = arith.constant 0 : i32
    return %c0_i32, %c0_i32_0 : i32, i32
  }
  func.func @transform_2(%arg0: i32) -> (i32, i32) {
    %c0_i32 = arith.constant 0 : i32
    %c0_i32_0 = arith.constant 0 : i32
    %c0_i32_1 = arith.constant 0 : i32
    return %c0_i32, %c0_i32_0 : i32, i32
  }
  func.func @transform_3(%arg0: i32) -> (i32, i32) {
    %c0_i32 = arith.constant 0 : i32
    %c0_i32_0 = arith.constant 0 : i32
    %c0_i32_1 = arith.constant 0 : i32
    return %c0_i32, %c0_i32_0 : i32, i32
  }
  func.func @transform_4(%arg0: i32) -> (i32, i32) {
    %c0_i32 = arith.constant 0 : i32
    %c0_i32_0 = arith.constant 0 : i32
    %c0_i32_1 = arith.constant 0 : i32
    return %c0_i32, %c0_i32_0 : i32, i32
  }
  func.func @transform_5(%arg0: i32) -> (i32, i32) {
    %c0_i32 = arith.constant 0 : i32
    %c0_i32_0 = arith.constant 0 : i32
    %c0_i32_1 = arith.constant 0 : i32
    return %c0_i32, %c0_i32_0 : i32, i32
  }
  func.func @transform_6(%arg0: i32) -> (i32, i32) {
    %c0_i32 = arith.constant 0 : i32
    %c0_i32_0 = arith.constant 0 : i32
    %c0_i32_1 = arith.constant 0 : i32
    return %c0_i32, %c0_i32_0 : i32, i32
  }
  func.func @transform_7(%arg0: i32) -> (i32, i32) {
    %c0_i32 = arith.constant 0 : i32
    %c0_i32_0 = arith.constant 0 : i32
    return %arg0, %c0_i32 : i32, i32
  }
}

</mosaic_0001>

<llo_original>
// kernel: multitask_explainer_forward.1
$region0: #{multitask_explainer_forward.1}
  #allocation0 [shape = 'u32[]', space=smem, size = 0x4, offset = 0x4, fixed_abs, tag = 'smem constant byte address 0x4 - core index']
  #allocation1 [shape = 'u32[144,128]{1,0:T(1,128)}', space=vmem, size = 0x12000, scoped, tag = 'internal scratch']
  %s0 = inlined_call_operand.vmem [shape: bf16[8,16], index: 0, kind: input, shape index: {}]
  %s1 = inlined_call_operand.vmem [shape: bf16[16,32], index: 1, kind: input, shape index: {}]
  %s2 = inlined_call_operand.vmem [shape: f32[1,32], index: 2, kind: input, shape index: {}]
  %s3 = inlined_call_operand.vmem [shape: bf16[32,32], index: 3, kind: input, shape index: {}]
  %s4 = inlined_call_operand.vmem [shape: f32[1,32], index: 4, kind: input, shape index: {}]
  %s5 = inlined_call_operand.vmem [shape: bf16[32,64], index: 5, kind: input, shape index: {}]
  %s6 = inlined_call_operand.vmem [shape: f32[1,64], index: 6, kind: input, shape index: {}]
  %s7 = inlined_call_operand.vmem [shape: f32[8,64], index: 7, kind: output, shape index: {}]
  %s8 = sld [smem:[#allocation0]]
  $region38: #{multitask_explainer_forward.1} parent=0
    _
  %s10 = ssub.s32 1, %s8
  %s11 = scalar_select 0, %s10, %s8
  // Predicated region
  $region2: #{multitask_explainer_forward.1} parent=0 // pred_check
    _
  $region3: #{multitask_explainer_forward.1} parent=0 // pred_check_branch
    %13 = sbr.rel (0) target = $region5
  $region4: #{multitask_explainer_forward.1} parent=0 // pred_region
    _
  $region5: #{multitask_explainer_forward.1} parent=0 // pred_fallthru
    _
  // Predicated region
  $region6: #{multitask_explainer_forward.1} parent=0 // pred_check
    _
  $region7: #{multitask_explainer_forward.1} parent=0 // pred_check_branch
    %15 = sbr.rel (0) target = $region9
  $region8: #{multitask_explainer_forward.1} parent=0 // pred_region
    _
  $region9: #{multitask_explainer_forward.1} parent=0 // pred_fallthru
    _
  // Predicated region
  $region10: #{multitask_explainer_forward.1} parent=0 // pred_check
    _
  $region11: #{multitask_explainer_forward.1} parent=0 // pred_check_branch
    %17 = sbr.rel (0) target = $region13
  $region12: #{multitask_explainer_forward.1} parent=0 // pred_region
    _
  $region13: #{multitask_explainer_forward.1} parent=0 // pred_fallthru
    _
  // Predicated region
  $region14: #{multitask_explainer_forward.1} parent=0 // pred_check
    _
  $region15: #{multitask_explainer_forward.1} parent=0 // pred_check_branch
    %19 = sbr.rel (0) target = $region17
  $region16: #{multitask_explainer_forward.1} parent=0 // pred_region
    _
  $region17: #{multitask_explainer_forward.1} parent=0 // pred_fallthru
    _
  // Predicated region
  $region18: #{multitask_explainer_forward.1} parent=0 // pred_check
    _
  $region19: #{multitask_explainer_forward.1} parent=0 // pred_check_branch
    %21 = sbr.rel (0) target = $region21
  $region20: #{multitask_explainer_forward.1} parent=0 // pred_region
    _
  $region21: #{multitask_explainer_forward.1} parent=0 // pred_fallthru
    _
  // Predicated region
  $region22: #{multitask_explainer_forward.1} parent=0 // pred_check
    _
  $region23: #{multitask_explainer_forward.1} parent=0 // pred_check_branch
    %23 = sbr.rel (0) target = $region25
  $region24: #{multitask_explainer_forward.1} parent=0 // pred_region
    _
  $region25: #{multitask_explainer_forward.1} parent=0 // pred_fallthru
    _
  // Predicated region
  $region26: #{multitask_explainer_forward.1} parent=0 // pred_check
    _
  $region27: #{multitask_explainer_forward.1} parent=0 // pred_check_branch
    %25 = sbr.rel (0) target = $region29
  $region28: #{multitask_explainer_forward.1} parent=0 // pred_region
    _
  $region29: #{multitask_explainer_forward.1} parent=0 // pred_fallthru
    _
  %v27 = vld [vmem:[%s0] sm:$0xf]
  %v28 = vld [vmem:[%s1] sm:$0xf]
  %v29 = vld [vmem:[%s1 + $0x4] sm:$0xf]
  %v30 = vld [vmem:[%s2] sm:$0x1]
  %v32 = vlaneseq
  %v33 = vshrl.u32 %v32, 7
  %v34 = vsub.s32 0, %v33
  %v35 = vrot.slane %v30, %v34
  %v39 = vunpack.c.l.b16 %v28
  %v40 = vunpack.c.l.b16 %v29
  %v41 = vpack.c.b16 %v40, %v39
  %vm43 = vcmask 130048
  %v45 = vsel %vm43, %v27, 0
  %47 = vmatprep.subr.bf16.mxu0 0
  %48 = vmatpush1.bf16.msra.mxu0 %v41
  %49 = vmatprep.subr.bf16.mxu0 0
  %50 = vmatpush1.bf16.msra.mxu0 0
  %51 = vmatprep.subr.bf16.mxu0 0
  %52 = vmatpush1.bf16.msra.mxu0 0
  %53 = vmatprep.subr.bf16.mxu0 0
  %54 = vmatpush1.bf16.msra.mxu0 0
  %55 = vmatprep.subr.bf16.mxu0 0
  %56 = vmatpush1.bf16.msra.mxu0 0
  %57 = vmatprep.subr.bf16.mxu0 0
  %58 = vmatpush1.bf16.msra.mxu0 0
  %59 = vmatprep.subr.bf16.mxu0 0
  %60 = vmatpush1.bf16.msra.mxu0 0
  %61 = vmatprep.subr.bf16.mxu0 0
  %62 = vmatpush1.bf16.msra.mxu0 0
  %63 = vmatprep.subr.bf16.mxu0 0
  %64 = vmatpush1.bf16.msra.mxu0 0
  %65 = vmatprep.subr.bf16.mxu0 0
  %66 = vmatpush1.bf16.msra.mxu0 0
  %67 = vmatprep.subr.bf16.mxu0 0
  %68 = vmatpush1.bf16.msra.mxu0 0
  %69 = vmatprep.subr.bf16.mxu0 0
  %70 = vmatpush1.bf16.msra.mxu0 0
  %71 = vmatprep.subr.bf16.mxu0 0
  %72 = vmatpush1.bf16.msra.mxu0 0
  %73 = vmatprep.subr.bf16.mxu0 0
  %74 = vmatpush1.bf16.msra.mxu0 0
  %75 = vmatprep.subr.bf16.mxu0 0
  %76 = vmatpush1.bf16.msra.mxu0 0
  %77 = vmatprep.subr.bf16.mxu0 0
  %78 = vmatpush1.bf16.msra.mxu0 0
  %79 = vmatprep.mubr.bf16.mxu0 0
  %80 = vmatmul.mubr.bf16.gmra.mrb[0].mxu0 %v45
  %v81 = vpop.f32.mrb[0].mxu0
  %v82 = vadd.f32 %v35, %v81
  %v83 = vpop.f32.mrb[0].mxu0
  %v84 = vpop.f32.mrb[0].mxu0
  %v85 = vpop.f32.mrb[0].mxu0
  %86 = vdwg.mxu0
  %v87 = vmul.f32 %v82, 0.01
  %v88 = vmax.f32 %v82, %v87
  %v89 = vpack.c.bf16 %v88, %v88
  %v90 = vld [vmem:[%s3] sm:$0xf]
  %v91 = vld [vmem:[%s3 + $0x4] sm:$0xf]
  %v92 = vld [vmem:[%s3 + $0x8] sm:$0xf]
  %v93 = vld [vmem:[%s3 + $0xc] sm:$0xf]
  %v94 = vld [vmem:[%s4] sm:$0x1]
  %v96 = vlaneseq
  %v97 = vshrl.u32 %v96, 7
  %v98 = vsub.s32 0, %v97
  %v99 = vrot.slane %v94, %v98
  %v105 = vunpack.c.l.b16 %v90
  %v106 = vunpack.c.l.b16 %v91
  %v107 = vunpack.c.l.b16 %v92
  %v108 = vunpack.c.l.b16 %v93
  %v109 = vpack.c.b16 %v106, %v105
  %v110 = vpack.c.b16 %v108, %v107
  %vm113 = vcmask 261120
  %v115 = vsel %vm113, %v89, 0
  %117 = vmatprep.subr.bf16.mxu0 0
  %118 = vmatpush1.bf16.msra.mxu0 %v109
  %119 = vmatprep.subr.bf16.mxu0 0
  %120 = vmatpush1.bf16.msra.mxu0 %v110
  %121 = vmatprep.subr.bf16.mxu0 0
  %122 = vmatpush1.bf16.msra.mxu0 0
  %123 = vmatprep.subr.bf16.mxu0 0
  %124 = vmatpush1.bf16.msra.mxu0 0
  %125 = vmatprep.subr.bf16.mxu0 0
  %126 = vmatpush1.bf16.msra.mxu0 0
  %127 = vmatprep.subr.bf16.mxu0 0
  %128 = vmatpush1.bf16.msra.mxu0 0
  %129 = vmatprep.subr.bf16.mxu0 0
  %130 = vmatpush1.bf16.msra.mxu0 0
  %131 = vmatprep.subr.bf16.mxu0 0
  %132 = vmatpush1.bf16.msra.mxu0 0
  %133 = vmatprep.subr.bf16.mxu0 0
  %134 = vmatpush1.bf16.msra.mxu0 0
  %135 = vmatprep.subr.bf16.mxu0 0
  %136 = vmatpush1.bf16.msra.mxu0 0
  %137 = vmatprep.subr.bf16.mxu0 0
  %138 = vmatpush1.bf16.msra.mxu0 0
  %139 = vmatprep.subr.bf16.mxu0 0
  %140 = vmatpush1.bf16.msra.mxu0 0
  %141 = vmatprep.subr.bf16.mxu0 0
  %142 = vmatpush1.bf16.msra.mxu0 0
  %143 = vmatprep.subr.bf16.mxu0 0
  %144 = vmatpush1.bf16.msra.mxu0 0
  %145 = vmatprep.subr.bf16.mxu0 0
  %146 = vmatpush1.bf16.msra.mxu0 0
  %147 = vmatprep.subr.bf16.mxu0 0
  %148 = vmatpush1.bf16.msra.mxu0 0
  %149 = vmatprep.mubr.bf16.mxu0 0
  %150 = vmatmul.mubr.bf16.gmra.mrb[0].mxu0 %v115
  %v151 = vpop.f32.mrb[0].mxu0
  %v152 = vadd.f32 %v99, %v151
  %v153 = vpop.f32.mrb[0].mxu0
  %v154 = vpop.f32.mrb[0].mxu0
  %v155 = vpop.f32.mrb[0].mxu0
  %156 = vdwg.mxu0
  %v157 = vmul.f32 %v152, 0.01
  %v158 = vmax.f32 %v152, %v157
  %v159 = vpack.c.bf16 %v158, %v158
  %v160 = vld [vmem:[%s5] sm:$0xf]
  %v161 = vld [vmem:[%s5 + $0x4] sm:$0xf]
  %v162 = vld [vmem:[%s5 + $0x8] sm:$0xf]
  %v163 = vld [vmem:[%s5 + $0xc] sm:$0xf]
  %v164 = vld [vmem:[%s6] sm:$0x1]
  %v166 = vlaneseq
  %v167 = vshrl.u32 %v166, 7
  %v168 = vsub.s32 0, %v167
  %v169 = vrot.slane %v164, %v168
  %v175 = vunpack.c.l.b16 %v160
  %v176 = vunpack.c.l.b16 %v161
  %v177 = vunpack.c.l.b16 %v162
  %v178 = vunpack.c.l.b16 %v163
  %v179 = vpack.c.b16 %v176, %v175
  %v180 = vpack.c.b16 %v178, %v177
  %v184 = vsel %vm113, %v159, 0
  %186 = vmatprep.subr.bf16.mxu0 0
  %187 = vmatpush1.bf16.msra.mxu0 %v179
  %188 = vmatprep.subr.bf16.mxu0 0
  %189 = vmatpush1.bf16.msra.mxu0 %v180
  %190 = vmatprep.subr.bf16.mxu0 0
  %191 = vmatpush1.bf16.msra.mxu0 0
  %192 = vmatprep.subr.bf16.mxu0 0
  %193 = vmatpush1.bf16.msra.mxu0 0
  %194 = vmatprep.subr.bf16.mxu0 0
  %195 = vmatpush1.bf16.msra.mxu0 0
  %196 = vmatprep.subr.bf16.mxu0 0
  %197 = vmatpush1.bf16.msra.mxu0 0
  %198 = vmatprep.subr.bf16.mxu0 0
  %199 = vmatpush1.bf16.msra.mxu0 0
  %200 = vmatprep.subr.bf16.mxu0 0
  %201 = vmatpush1.bf16.msra.mxu0 0
  %202 = vmatprep.subr.bf16.mxu0 0
  %203 = vmatpush1.bf16.msra.mxu0 0
  %204 = vmatprep.subr.bf16.mxu0 0
  %205 = vmatpush1.bf16.msra.mxu0 0
  %206 = vmatprep.subr.bf16.mxu0 0
  %207 = vmatpush1.bf16.msra.mxu0 0
  %208 = vmatprep.subr.bf16.mxu0 0
  %209 = vmatpush1.bf16.msra.mxu0 0
  %210 = vmatprep.subr.bf16.mxu0 0
  %211 = vmatpush1.bf16.msra.mxu0 0
  %212 = vmatprep.subr.bf16.mxu0 0
  %213 = vmatpush1.bf16.msra.mxu0 0
  %214 = vmatprep.subr.bf16.mxu0 0
  %215 = vmatpush1.bf16.msra.mxu0 0
  %216 = vmatprep.subr.bf16.mxu0 0
  %217 = vmatpush1.bf16.msra.mxu0 0
  %218 = vmatprep.mubr.bf16.mxu0 0
  %219 = vmatmul.mubr.bf16.gmra.mrb[0].mxu0 %v184
  %v220 = vpop.f32.mrb[0].mxu0
  %v221 = vadd.f32 %v169, %v220
  %v222 = vpop.f32.mrb[0].mxu0
  %v223 = vpop.f32.mrb[0].mxu0
  %v224 = vpop.f32.mrb[0].mxu0
  %225 = vdwg.mxu0
  %vm226 = vcmask 523264
  %227 = vst.msk [vmem:[%s7] sm:$0xff] %vm226, %v221
  // Predicated region
  $region30: #{multitask_explainer_forward.1} parent=0 // pred_check
    _
  $region31: #{multitask_explainer_forward.1} parent=0 // pred_check_branch
    %229 = sbr.rel (0) target = $region33
  $region32: #{multitask_explainer_forward.1} parent=0 // pred_region
    _
  $region33: #{multitask_explainer_forward.1} parent=0 // pred_fallthru
    _
  // Predicated region
  $region34: #{multitask_explainer_forward.1} parent=0 // pred_check
    _
  $region35: #{multitask_explainer_forward.1} parent=0 // pred_check_branch
    %231 = sbr.rel (0) target = $region37
  $region36: #{multitask_explainer_forward.1} parent=0 // pred_region
    _
  $region37: #{multitask_explainer_forward.1} parent=0 // pred_fallthru
    _

</llo_original>
